<compile_context>
chip_gen: v5e
topology: v5e:2x2
jax: 0.10.0
libtpu: 0.0.40
codegen_flags: <defaults>
</compile_context>

<pallas_src>
import functools
import math

import jax
import jax.numpy as jnp
from jax import lax
from jax.experimental import pallas as pl
from jax.experimental.pallas import tpu as pltpu


def _round_up(v, m):
    return (v + m - 1) // m * m


def _gemm_bn_act_kernel(p_ref, w_ref, ss_ref, o_ref, *, apply_relu, nk):
    """One (tm, tn) output tile; grid axis 2 (length nk) reduces over K."""
    prod = jnp.dot(p_ref[...], w_ref[...],
                   preferred_element_type=jnp.float32)

    def _epilogue(acc):
        y = acc * ss_ref[0:1, :] + ss_ref[1:2, :]     # fused BN (+ conv bias)
        if apply_relu:
            y = jnp.maximum(y, 0.0)
        return y.astype(o_ref.dtype)

    if nk == 1:
        # Single K block: no cross-step accumulation, no extra VMEM round trip.
        o_ref[...] = _epilogue(prod)
    else:
        k = pl.program_id(2)

        @pl.when(k == 0)
        def _():
            o_ref[...] = prod

        @pl.when(k > 0)
        def _():
            o_ref[...] = o_ref[...] + prod

        @pl.when(k == nk - 1)
        def _():
            o_ref[...] = _epilogue(o_ref[...])


def _fused_gemm(patches, w_mat, scale, shift, *, apply_relu,
                tm=None, tn=None, tk=None):
    """Y[:M,:C_out] = relu((patches @ w_mat) * scale + shift).

    patches: (M, K) bf16, w_mat: (K, C_out) bf16, scale/shift: (C_out,) f32.
    """
    M, K = patches.shape
    K2, C_out = w_mat.shape
    assert K == K2

    # ---- tile selection --------------------------------------------------
    # tn: lane-dense output tiles; 256 only pays off when C_out > 128.
    if tn is None:
        tn = 128 if C_out <= 128 else 256
    N_pad = _round_up(C_out, tn)

    # tm: grow toward 512, but keep >= 2 M tiles when M allows so both v7x
    # TensorCores get work along the "parallel" M axis.
    if tm is None:
        m128 = -(-M // 128)
        tm = 128 * max(1, min(4, m128 // 2))
    M_pad = _round_up(M, tm)

    # K: a single full-extent block when small (no K grid axis, no pad-to-128
    # MXU waste); otherwise 512-wide K tiles accumulated in place into o_ref.
    if tk is None:
        tk = K if K <= 512 else 512
    if K <= tk:
        K_pad = _round_up(K, 16)          # bf16 sublane packing granularity
        tk = K_pad
    else:
        tk = _round_up(tk, 128)
        K_pad = _round_up(K, tk)
    nk = K_pad // tk

    # ---- pad operands (already bf16) and merge BN into one (2, N_pad) -----
    p = jnp.pad(patches, ((0, M_pad - M), (0, K_pad - K)))
    w = jnp.pad(w_mat, ((0, K_pad - K), (0, N_pad - C_out)))
    ss = jnp.stack([scale.astype(jnp.float32), shift.astype(jnp.float32)])
    ss = jnp.pad(ss, ((0, 0), (0, N_pad - C_out)))

    grid = (M_pad // tm, N_pad // tn, nk)

    # VMEM budget from the actual tiles: double-buffered bf16 inputs + f32
    # output + tiny BN tile, x2 headroom, clamped to [8 MiB, 40 MiB] so it is
    # safe on v7x (64 MiB physical VMEM).
    tile_bytes = 2 * (tm * tk * 2 + tk * tn * 2 + 2 * tn * 4 + tm * tn * 4)
    vmem_limit = min(max(2 * tile_bytes, 8 * 1024 * 1024), 40 * 1024 * 1024)

    cost = pl.CostEstimate(
        flops=2 * M_pad * K_pad * N_pad,
        transcendentals=0,
        bytes_accessed=(2 * (M_pad * K_pad + K_pad * N_pad)
                        + 4 * (M_pad * N_pad + 2 * N_pad)),
    )

    kernel = functools.partial(_gemm_bn_act_kernel,
                               apply_relu=apply_relu, nk=nk)

    out = pl.pallas_call(
        kernel,
        out_shape=jax.ShapeDtypeStruct((M_pad, N_pad), jnp.float32),
        grid=grid,
        in_specs=[
            pl.BlockSpec((tm, tk), lambda i, j, k: (i, k)),   # bf16 patches
            pl.BlockSpec((tk, tn), lambda i, j, k: (k, j)),   # bf16 weights
            pl.BlockSpec((2, tn), lambda i, j, k: (0, j)),    # BN scale/shift
        ],
        out_specs=pl.BlockSpec((tm, tn), lambda i, j, k: (i, j)),
        compiler_params=pltpu.CompilerParams(
            dimension_semantics=("parallel", "parallel", "arbitrary"),
            vmem_limit_bytes=vmem_limit,
        ),
        cost_estimate=cost,
    )(p, w, ss)

    return out[:M, :C_out]


def _im2col(x_nhwc, kh, kw, stride, dilation):
    """Extract conv patches. K ordering is ((i*kw + j)*C_in + c)."""
    N, H, W, C = x_nhwc.shape
    H_out = (H - (kh - 1) * dilation - 1) // stride + 1
    W_out = (W - (kw - 1) * dilation - 1) // stride + 1
    cols = []
    for i in range(kh):
        for j in range(kw):
            h0 = i * dilation
            w0 = j * dilation
            patch = x_nhwc[:, h0:h0 + (H_out - 1) * stride + 1:stride,
                              w0:w0 + (W_out - 1) * stride + 1:stride, :]
            cols.append(patch)
    patches = jnp.concatenate(cols, axis=-1)      # (N, H_out, W_out, kh*kw*C)
    return patches.reshape(N * H_out * W_out, kh * kw * C), (H_out, W_out)


def basic_conv_pallas(x, weight, *, stride=1, padding=0, dilation=1, groups=1,
                      conv_bias=None, bn_params=None, relu=True,
                      tm=None, tn=None, tk=None):
    """Forward of BasicConv: Conv2d -> BatchNorm2d (eval mode) -> ReLU.

    x:         (N, C_in, H, W)        float32, NCHW (torch layout)
    weight:    (C_out, C_in, kh, kw)  torch Conv2d weight layout
    bn_params: (gamma, beta, running_mean, running_var, eps) or None

    The conv GEMM intentionally runs with bf16 operands / f32 accumulation on
    the MXU (accuracy contract: ~1e-2 absolute vs. full-f32 math).
    """
    assert groups == 1
    N, C_in, H, W = x.shape
    C_out, C_in_w, kh, kw = weight.shape
    assert C_in == C_in_w

    # NCHW -> NHWC, cast to bf16 *before* im2col so the materialized patch
    # matrix and its DMA are half size.
    x_nhwc = jnp.transpose(x, (0, 2, 3, 1)).astype(jnp.bfloat16)
    if padding > 0:
        x_nhwc = jnp.pad(
            x_nhwc, ((0, 0), (padding, padding), (padding, padding), (0, 0)))

    patches, (H_out, W_out) = _im2col(x_nhwc, kh, kw, stride, dilation)

    # (C_out, C_in, kh, kw) -> (kh, kw, C_in, C_out) -> (kh*kw*C_in, C_out),
    # matching the im2col K ordering.
    w_mat = jnp.transpose(weight, (2, 3, 1, 0)).reshape(
        kh * kw * C_in, C_out).astype(jnp.bfloat16)

    # Fold BatchNorm (+ optional conv bias) into per-channel scale/shift (f32).
    if bn_params is not None:
        gamma, beta, running_mean, running_var, eps = bn_params
        scale = gamma * lax.rsqrt(running_var + eps)
        shift = beta - running_mean * scale
        if conv_bias is not None:
            shift = shift + conv_bias * scale
    else:
        scale = jnp.ones((C_out,), jnp.float32)
        shift = (conv_bias if conv_bias is not None
                 else jnp.zeros((C_out,), jnp.float32))

    y2d = _fused_gemm(patches, w_mat, scale, shift, apply_relu=relu,
                      tm=tm, tn=tn, tk=tk)

    y = y2d.reshape(N, H_out, W_out, C_out)
    return jnp.transpose(y, (0, 3, 1, 2))            # back to NCHW


if __name__ == "__main__":
    # BasicConv(in_planes=4, out_planes=8, kernel_size=3, stride=1, padding=1,
    #           bias=False, bn=True, relu=True) on a (2, 4, 16, 16) input.
    N, C_IN, H, W = 2, 4, 16, 16
    C_OUT, KSIZE, STRIDE, PAD, DIL = 8, 3, 1, 1, 1
    EPS = 1e-5

    key = jax.random.PRNGKey(0)
    kx, kw_, kg, kb, km, kv = jax.random.split(key, 6)

    x = jax.random.normal(kx, (N, C_IN, H, W), dtype=jnp.float32)

    fan_in = C_IN * KSIZE * KSIZE
    bound = 1.0 / math.sqrt(fan_in)
    weight = jax.random.uniform(kw_, (C_OUT, C_IN, KSIZE, KSIZE),
                                minval=-bound, maxval=bound, dtype=jnp.float32)

    gamma = jax.random.uniform(kg, (C_OUT,), minval=0.5, maxval=1.5,
                               dtype=jnp.float32)
    beta = 0.1 * jax.random.normal(kb, (C_OUT,), dtype=jnp.float32)
    running_mean = 0.1 * jax.random.normal(km, (C_OUT,), dtype=jnp.float32)
    running_var = jax.random.uniform(kv, (C_OUT,), minval=0.5, maxval=1.5,
                                     dtype=jnp.float32)
    bn_params = (gamma, beta, running_mean, running_var, EPS)

    y = basic_conv_pallas(x, weight, stride=STRIDE, padding=PAD, dilation=DIL,
                          groups=1, conv_bias=None, bn_params=bn_params,
                          relu=True)
    jax.block_until_ready(y)
    assert y.shape == (N, C_OUT, H, W), y.shape

    scale_ref = gamma / jnp.sqrt(running_var + EPS)
    shift_ref = beta - running_mean * scale_ref

    # Reference 1: identical math (bf16 operands, f32 accumulation) via XLA's
    # conv — checks the kernel / im2col / BN-fold structure tightly.
    y_conv_bf16 = lax.conv_general_dilated(
        x.astype(jnp.bfloat16), weight.astype(jnp.bfloat16),
        window_strides=(STRIDE, STRIDE), padding=((PAD, PAD), (PAD, PAD)),
        rhs_dilation=(DIL, DIL), dimension_numbers=("NCHW", "OIHW", "NCHW"),
        preferred_element_type=jnp.float32, precision=lax.Precision.HIGHEST)
    y_ref_bf16 = jnp.maximum(y_conv_bf16 * scale_ref[None, :, None, None]
                             + shift_ref[None, :, None, None], 0.0)
    assert jnp.allclose(y, y_ref_bf16, atol=1e-3, rtol=1e-3), (
        float(jnp.max(jnp.abs(y - y_ref_bf16))))

    # Reference 2: full-f32 torch-equivalent math; loose tolerance quantifies
    # the intentional bf16 operand cast on the MXU.
    y_conv_f32 = lax.conv_general_dilated(
        x, weight, window_strides=(STRIDE, STRIDE),
        padding=((PAD, PAD), (PAD, PAD)), rhs_dilation=(DIL, DIL),
        dimension_numbers=("NCHW", "OIHW", "NCHW"),
        precision=lax.Precision.HIGHEST)
    y_ref_f32 = jnp.maximum(y_conv_f32 * scale_ref[None, :, None, None]
                            + shift_ref[None, :, None, None], 0.0)
    assert jnp.allclose(y, y_ref_f32, atol=5e-2, rtol=5e-2), (
        float(jnp.max(jnp.abs(y - y_ref_f32))))

    print("KERNEL_OK")
</pallas_src>

<mosaic_0001>
module attributes {stable_mosaic.version = 11 : i64} {
  func.func @_gemm_bn_act_kernel(%arg0: i32, %arg1: i32, %arg2: i32, %arg3: memref<256x48xbf16, #tpu.memory_space<vmem>>, %arg4: memref<48x128xbf16, #tpu.memory_space<vmem>>, %arg5: memref<2x128xf32, #tpu.memory_space<vmem>>, %arg6: memref<256x128xf32, #tpu.memory_space<vmem>>) attributes {dimension_semantics = [#tpu.dimension_semantics<parallel>, #tpu.dimension_semantics<parallel>, #tpu.dimension_semantics<arbitrary>], iteration_bounds = array<i64: 2, 1, 1>, scalar_prefetch = 0 : i64, scratch_operands = 0 : i64, tpu.core_type = #tpu.core_type<tc>, window_params = [{transform_indices = @transform_0, window_bounds = array<i64: 256, 48>}, {transform_indices = @transform_1, window_bounds = array<i64: 48, 128>}, {transform_indices = @transform_2, window_bounds = array<i64: 2, 128>}, {transform_indices = @transform_3, window_bounds = array<i64: 256, 128>}]} {
    %c0 = arith.constant 0 : index
    %c0_0 = arith.constant 0 : index
    %0 = vector.load %arg3[%c0, %c0_0] : memref<256x48xbf16, #tpu.memory_space<vmem>>, vector<256x48xbf16>
    %c0_1 = arith.constant 0 : index
    %c0_2 = arith.constant 0 : index
    %1 = vector.load %arg4[%c0_1, %c0_2] : memref<48x128xbf16, #tpu.memory_space<vmem>>, vector<48x128xbf16>
    %cst = arith.constant dense<0.000000e+00> : vector<256x128xf32>
    %2 = tpu.matmul %0, %1, %cst {dimension_numbers = #tpu.dot_dimension_numbers<[1], [0], [0], [1], [0, 0, 1, 1], [], []>} : vector<256x48xbf16>, vector<48x128xbf16>, vector<256x128xf32> -> vector<256x128xf32>
    %c0_3 = arith.constant 0 : index
    %c0_4 = arith.constant 0 : index
    %3 = vector.load %arg5[%c0_3, %c0_4] : memref<2x128xf32, #tpu.memory_space<vmem>>, vector<1x128xf32>
    %4 = vector.broadcast %3 : vector<1x128xf32> to vector<256x128xf32>
    %5 = arith.mulf %2, %4 : vector<256x128xf32>
    %c1 = arith.constant 1 : index
    %c0_5 = arith.constant 0 : index
    %6 = vector.load %arg5[%c1, %c0_5] : memref<2x128xf32, #tpu.memory_space<vmem>>, vector<1x128xf32>
    %7 = vector.broadcast %6 : vector<1x128xf32> to vector<256x128xf32>
    %8 = arith.addf %5, %7 : vector<256x128xf32>
    %cst_6 = arith.constant 0.000000e+00 : f32
    %9 = vector.broadcast %cst_6 : f32 to vector<256x128xf32>
    %10 = arith.maximumf %8, %9 : vector<256x128xf32>
    %c0_7 = arith.constant 0 : index
    %c0_8 = arith.constant 0 : index
    %11 = vector.load %arg6[%c0_7, %c0_8] : memref<256x128xf32, #tpu.memory_space<vmem>>, vector<256x128xf32>
    tpu.vector_store %arg6[%c0_7, %c0_8], %10 {strides = array<i32>} : memref<256x128xf32, #tpu.memory_space<vmem>>, vector<256x128xf32>,
    return
  }
  func.func @transform_0(%arg0: i32, %arg1: i32, %arg2: i32) -> (i32, i32) {
    %c0_i32 = arith.constant 0 : i32
    return %arg0, %arg2 : i32, i32
  }
  func.func @transform_1(%arg0: i32, %arg1: i32, %arg2: i32) -> (i32, i32) {
    %c0_i32 = arith.constant 0 : i32
    return %arg2, %arg1 : i32, i32
  }
  func.func @transform_2(%arg0: i32, %arg1: i32, %arg2: i32) -> (i32, i32) {
    %c0_i32 = arith.constant 0 : i32
    %c0_i32_0 = arith.constant 0 : i32
    return %c0_i32, %arg1 : i32, i32
  }
  func.func @transform_3(%arg0: i32, %arg1: i32, %arg2: i32) -> (i32, i32) {
    %c0_i32 = arith.constant 0 : i32
    return %arg0, %arg1 : i32, i32
  }
}

</mosaic_0001>

<llo_original>
// kernel: tpu_custom_call.1
$region0: #{tpu_custom_call.1}
  #allocation0 [shape = 'u32[]', space=smem, size = 0x4, offset = 0x4, fixed_abs, tag = 'smem constant byte address 0x4 - core index']
  #allocation1 [shape = 'u32[72,128]{1,0:T(1,128)}', space=vmem, size = 0x9000, scoped, tag = 'internal scratch']
  %s0 = inlined_call_operand.vmem [shape: bf16[512,48], index: 0, kind: input, shape index: {}]
  %s1 = inlined_call_operand.vmem [shape: bf16[48,128], index: 1, kind: input, shape index: {}]
  %s2 = inlined_call_operand.vmem [shape: f32[2,128], index: 2, kind: input, shape index: {}]
  %s3 = inlined_call_operand.hbm [shape: f32[512,128], index: 3, kind: output, shape index: {}]
  %s4 = sld [smem:[#allocation0]]
  $region45: #{tpu_custom_call.1} parent=0
    _
  %s6 = ssub.s32 1, %s4
  %s7 = scalar_select 0, %s6, %s4
  $region1: #{tpu_custom_call.1} parent=0
    #allocation2 [shape = 'u8[262144]{0}', space=vmem, size = 0x40000, scoped, tag = 'output window, operand 0']
    #allocation3 [shape = 's32[2]{0}', space=sflag, size = 0x8, scoped, tag = 'scoped memory for tpu_custom_call.1']
    %8 = vsyncpa [#allocation3], 0
    %s9 = scalar_lea.sflag [#allocation3], 1
    %10 = vsyncpa %s9, 0
    loop: start=0, step=1, limit=4
    $region2: #{tpu_custom_call.1} parent=1 // loop_pre_header
      _
    $region3: #{tpu_custom_call.1} parent=1 // loop_header
      %s12 = sphi 0, %s16
      %p13 = scmp.ge.s32.totalorder %s12, 4
      %s19 = sphi 0, %s38
      %s20 = sphi 0, %s34
      %s21 = sphi 0, %s30
      %s22 = sphi 0, %s19
      %s23 = sphi 0, %s20
      %s24 = sphi 0, %s21
      %s25 = sphi 0, %s22
      %s26 = sphi 0, %s23
      %s27 = sphi 0, %s24
      %s43 = sphi 0, %s45
      %s46 = sphi 0, %s43
      %s47 = sphi 0, %s46
      %s63 = sphi 0, %s47
      %s71 = sphi 0, %s73
      %s74 = sphi 0, %s71
      %s75 = sphi 0, %s74
      %s91 = sphi 0, %s75
      %s97 = sphi 0, %s99
      %s100 = sphi 0, %s97
      %s101 = sphi 0, %s100
      %s117 = sphi 0, %s101
      %s125 = sphi 0, %s127
      %s128 = sphi 0, %s125
      %s129 = sphi 0, %s128
      %s145 = sphi 0, %s129
    $region4: #{tpu_custom_call.1} parent=1 // loop_header_branch
      %15 = sbr.rel (%p13) target = $region8
    $region5: #{tpu_custom_call.1} parent=1 // loop_body
      %s17 = ssub.s32 %s12, 1
      %s18 = ssub.s32 %s12, 2
      %s28 = sadd.s32 1, %s21
      %p29 = scmp.ge.s32.totalorder %s28, 1
      %s30 = scalar_select %p29, 0, %s28
      %s31 = sadd.s32 1, %s20
      %s32 = scalar_select %p29, %s31, %s20
      %p33 = scmp.ge.s32.totalorder %s32, 1
      %s34 = scalar_select %p33, 0, %s32
      %s35 = sadd.s32 1, %s19
      %s36 = scalar_select %p33, %s35, %s19
      %p37 = scmp.ge.s32.totalorder %s36, 2
      %s38 = scalar_select %p37, 0, %s36
      %s39 = ssub.s32 %s19, %s38
      %s40 = ssub.s32 %s21, %s30
      %s41 = sor.u32 %s39, %s40
      %p42 = scmp.eq.s32.totalorder %s41, 0
      %s44 = sadd.s32 %s43, 1
      %s45 = scalar_select %p42, %s43, %s44
      %p48 = pneg %p42
      %p49 = scmp.eq.s32.totalorder %s12, 1
      %p50 = por %p48, %p49
      %p51 = scmp.ne.s32.totalorder %s43, %s46
      %p52 = scmp.eq.s32.totalorder %s12, 0
      %p53 = por %p51, %p52
      %p54 = scmp.ne.s32.totalorder %s43, %s46
      %p55 = scmp.eq.s32.totalorder %s17, 1
      %p56 = por %p54, %p55
      %p57 = scmp.ne.s32.totalorder %s46, %s47
      %p58 = scmp.eq.s32.totalorder %s17, 0
      %p59 = por %p57, %p58
      %p60 = scmp.ne.s32.totalorder %s46, %s47
      %p61 = scmp.eq.s32.totalorder %s18, 1
      %p62 = por %p60, %p61
      %p64 = scmp.ne.s32.totalorder %s47, %s63
      %p65 = scmp.eq.s32.totalorder %s18, 0
      %p66 = por %p64, %p65
      %s67 = ssub.s32 %s21, %s30
      %s68 = ssub.s32 %s20, %s34
      %s69 = sor.u32 %s67, %s68
      %p70 = scmp.eq.s32.totalorder %s69, 0
      %s72 = sadd.s32 %s71, 1
      %s73 = scalar_select %p70, %s71, %s72
      %p76 = pneg %p70
      %p77 = scmp.eq.s32.totalorder %s12, 1
      %p78 = por %p76, %p77
      %p79 = scmp.ne.s32.totalorder %s71, %s74
      %p80 = scmp.eq.s32.totalorder %s12, 0
      %p81 = por %p79, %p80
      %p82 = scmp.ne.s32.totalorder %s71, %s74
      %p83 = scmp.eq.s32.totalorder %s17, 1
      %p84 = por %p82, %p83
      %p85 = scmp.ne.s32.totalorder %s74, %s75
      %p86 = scmp.eq.s32.totalorder %s17, 0
      %p87 = por %p85, %p86
      %p88 = scmp.ne.s32.totalorder %s74, %s75
      %p89 = scmp.eq.s32.totalorder %s18, 1
      %p90 = por %p88, %p89
      %p92 = scmp.ne.s32.totalorder %s75, %s91
      %p93 = scmp.eq.s32.totalorder %s18, 0
      %p94 = por %p92, %p93
      %s95 = ssub.s32 %s20, %s34
      %p96 = scmp.eq.s32.totalorder %s95, 0
      %s98 = sadd.s32 %s97, 1
      %s99 = scalar_select %p96, %s97, %s98
      %p102 = pneg %p96
      %p103 = scmp.eq.s32.totalorder %s12, 1
      %p104 = por %p102, %p103
      %p105 = scmp.ne.s32.totalorder %s97, %s100
      %p106 = scmp.eq.s32.totalorder %s12, 0
      %p107 = por %p105, %p106
      %p108 = scmp.ne.s32.totalorder %s97, %s100
      %p109 = scmp.eq.s32.totalorder %s17, 1
      %p110 = por %p108, %p109
      %p111 = scmp.ne.s32.totalorder %s100, %s101
      %p112 = scmp.eq.s32.totalorder %s17, 0
      %p113 = por %p111, %p112
      %p114 = scmp.ne.s32.totalorder %s100, %s101
      %p115 = scmp.eq.s32.totalorder %s18, 1
      %p116 = por %p114, %p115
      %p118 = scmp.ne.s32.totalorder %s101, %s117
      %p119 = scmp.eq.s32.totalorder %s18, 0
      %p120 = por %p118, %p119
      %s121 = ssub.s32 %s19, %s38
      %s122 = ssub.s32 %s20, %s34
      %s123 = sor.u32 %s121, %s122
      %p124 = scmp.eq.s32.totalorder %s123, 0
      %s126 = sadd.s32 %s125, 1
      %s127 = scalar_select %p124, %s125, %s126
      %p130 = pneg %p124
      %p131 = scmp.eq.s32.totalorder %s12, 1
      %p132 = por %p130, %p131
      %p133 = scmp.ne.s32.totalorder %s125, %s128
      %p134 = scmp.eq.s32.totalorder %s12, 0
      %p135 = por %p133, %p134
      %p136 = scmp.ne.s32.totalorder %s125, %s128
      %p137 = scmp.eq.s32.totalorder %s17, 1
      %p138 = por %p136, %p137
      %p139 = scmp.ne.s32.totalorder %s128, %s129
      %p140 = scmp.eq.s32.totalorder %s17, 0
      %p141 = por %p139, %p140
      %p142 = scmp.ne.s32.totalorder %s128, %s129
      %p143 = scmp.eq.s32.totalorder %s18, 1
      %p144 = por %p142, %p143
      %p146 = scmp.ne.s32.totalorder %s129, %s145
      %p147 = scmp.eq.s32.totalorder %s18, 0
      %p148 = por %p146, %p147
      %p149 = scmp.le.s32.totalorder 1, %s12
      %p150 = scmp.lt.s32.totalorder %s12, 3
      %p151 = pnand %p149, %p150
      %p152 = pneg %p151
      // Predicated region
      $region9: #{tpu_custom_call.1} parent=5 // pred_check
        _
      $region10: #{tpu_custom_call.1} parent=5 // pred_check_branch
        %154 = sbr.rel (%p151) target = $region12
      $region11: #{tpu_custom_call.1} parent=5 // pred_region
        %s155 = ssub.s32 %s12, 1
        // Predicated region
        $region13: #{tpu_custom_call.1} parent=11 // pred_check
          %p156 = pneg %p87
        $region14: #{tpu_custom_call.1} parent=11 // pred_check_branch
          %158 = sbr.rel (%p156) target = $region16
        $region15: #{tpu_custom_call.1} parent=11 // pred_region
          %s159 = smul.u32 6, %s24
          %p160 = scmp.lt.s32.totalorder %s159, 5
          %s161 = scalar_select %p160, %s159, 5
          %p162 = scmp.lt.s32.totalorder %s23, 0
          %s163 = scalar_select %p162, %s23, 0
          %s164 = sadd.s32 %s163, %s161
          %s165 = smul.addr %s164, 4
          %s166 = scalar_lea.vmem %s1, %s165
          %s167 = smul.u32 6, %s24
        $region16: #{tpu_custom_call.1} parent=11 // pred_fallthru
          _
        // Predicated region
        $region17: #{tpu_custom_call.1} parent=11 // pred_check
          %p168 = pneg %p113
        $region18: #{tpu_custom_call.1} parent=11 // pred_check_branch
          %170 = sbr.rel (%p168) target = $region20
        $region19: #{tpu_custom_call.1} parent=11 // pred_region
          %p171 = scmp.lt.s32.totalorder %s23, 0
          %s172 = scalar_select %p171, %s23, 0
          %s173 = smul.addr %s172, 2
          %s174 = scalar_lea.vmem %s2, %s173
        $region20: #{tpu_custom_call.1} parent=11 // pred_fallthru
          _
      $region12: #{tpu_custom_call.1} parent=5 // pred_fallthru
        _
      %p175 = scmp.lt.s32.totalorder %s12, 2
      // Predicated region
      $region21: #{tpu_custom_call.1} parent=5 // pred_check
        %p176 = pneg %p175
      $region22: #{tpu_custom_call.1} parent=5 // pred_check_branch
        %178 = sbr.rel (%p176) target = $region24
      $region23: #{tpu_custom_call.1} parent=5 // pred_region
        // Predicated region
        $region25: #{tpu_custom_call.1} parent=23 // pred_check
          %p179 = pneg %p53
        $region26: #{tpu_custom_call.1} parent=23 // pred_check_branch
          %181 = sbr.rel (%p179) target = $region28
        $region27: #{tpu_custom_call.1} parent=23 // pred_region
          %s182 = smul.u32 32, %s19
          %p183 = scmp.lt.s32.totalorder %s182, 63
          %s184 = scalar_select %p183, %s182, 63
          %p185 = scmp.lt.s32.totalorder %s21, 0
          %s186 = scalar_select %p185, %s21, 0
          %s187 = sadd.s32 %s186, %s184
          %s188 = smul.addr %s187, 4
          %s189 = scalar_lea.vmem %s0, %s188
          %s190 = smul.u32 32, %s19
        $region28: #{tpu_custom_call.1} parent=23 // pred_fallthru
          _
      $region24: #{tpu_custom_call.1} parent=5 // pred_fallthru
        _
      %p191 = scmp.le.s32.totalorder 1, %s12
      %p192 = scmp.lt.s32.totalorder %s12, 3
      %p193 = pnand %p191, %p192
      %p194 = pneg %p193
      // Predicated region
      $region29: #{tpu_custom_call.1} parent=5 // pred_check
        _
      $region30: #{tpu_custom_call.1} parent=5 // pred_check_branch
        %196 = sbr.rel (%p193) target = $region32
      $region31: #{tpu_custom_call.1} parent=5 // pred_region
        %s197 = ssub.s32 %s12, 1
        %s198 = smul.u32 32, %s22
        %p199 = scmp.lt.s32.totalorder %s198, 63
        %s200 = scalar_select %p199, %s198, 63
        %p201 = scmp.lt.s32.totalorder %s24, 0
        %s202 = scalar_select %p201, %s24, 0
        %s203 = sadd.s32 %s202, %s200
        %s204 = smul.addr %s203, 4
        %s205 = scalar_lea.vmem %s0, %s204
        %p206 = pneg %p59
        %p207 = pneg %p56
        %s208 = smul.u32 6, %s24
        %p209 = scmp.lt.s32.totalorder %s208, 5
        %s210 = scalar_select %p209, %s208, 5
        %p211 = scmp.lt.s32.totalorder %s23, 0
        %s212 = scalar_select %p211, %s23, 0
        %s213 = sadd.s32 %s212, %s210
        %s214 = smul.addr %s213, 4
        %s215 = scalar_lea.vmem %s1, %s214
        %p216 = pneg %p87
        %p217 = pneg %p84
        %p218 = scmp.lt.s32.totalorder %s23, 0
        %s219 = scalar_select %p218, %s23, 0
        %s220 = smul.addr %s219, 2
        %s221 = scalar_lea.vmem %s2, %s220
        %p222 = pneg %p113
        %p223 = pneg %p110
        %p224 = pneg %p141
        %p225 = pneg %p138
        %s226 = sand.u32 %s128, 1
        %s227 = scalar_lea.sflag [#allocation3], %s226
        %s228 = sand.u32 %s128, 1
        %s229 = smul.addr %s228, 256
        %s230 = scalar_lea.vmem [#allocation2], %s229
        %s231 = smul.u32 32, %s22
        %p232 = scmp.lt.s32.totalorder %s231, 63
        %s233 = scalar_select %p232, %s231, 63
        %p234 = scmp.lt.s32.totalorder %s24, 0
        %s235 = scalar_select %p234, %s24, 0
        %s236 = sadd.s32 %s235, %s233
        %s237 = smul.addr %s236, 4
        %s238 = scalar_lea.vmem %s0, %s237
        %s239 = smul.u32 32, %s22
        %s240 = smul.u32 6, %s24
        %p241 = scmp.lt.s32.totalorder %s240, 5
        %s242 = scalar_select %p241, %s240, 5
        %p243 = scmp.lt.s32.totalorder %s23, 0
        %s244 = scalar_select %p243, %s23, 0
        %s245 = sadd.s32 %s244, %s242
        %s246 = smul.addr %s245, 4
        %s247 = scalar_lea.vmem %s1, %s246
        %s248 = smul.u32 6, %s24
        %p249 = scmp.lt.s32.totalorder %s23, 0
        %s250 = scalar_select %p249, %s23, 0
        %s251 = smul.addr %s250, 2
        %s252 = scalar_lea.vmem %s2, %s251
        %s253 = smul.u32 32, %s22
        %v255 = vld [vmem:[%s238] sm:$0xf]
        %v256 = vld [vmem:[%s238 + $0x4] sm:$0xf]
        %v257 = vld [vmem:[%s238 + $0x8] sm:$0xf]
        %v258 = vld [vmem:[%s238 + $0xc] sm:$0xf]
        %v259 = vld [vmem:[%s238 + $0x10] sm:$0xf]
        %v260 = vld [vmem:[%s238 + $0x14] sm:$0xf]
        %v261 = vld [vmem:[%s238 + $0x18] sm:$0xf]
        %v262 = vld [vmem:[%s238 + $0x1c] sm:$0xf]
        %v263 = vld [vmem:[%s238 + $0x20] sm:$0xf]
        %v264 = vld [vmem:[%s238 + $0x24] sm:$0xf]
        %v265 = vld [vmem:[%s238 + $0x28] sm:$0xf]
        %v266 = vld [vmem:[%s238 + $0x2c] sm:$0xf]
        %v267 = vld [vmem:[%s238 + $0x30] sm:$0xf]
        %v268 = vld [vmem:[%s238 + $0x34] sm:$0xf]
        %v269 = vld [vmem:[%s238 + $0x38] sm:$0xf]
        %v270 = vld [vmem:[%s238 + $0x3c] sm:$0xf]
        %v271 = vld [vmem:[%s238 + $0x40] sm:$0xf]
        %v272 = vld [vmem:[%s238 + $0x44] sm:$0xf]
        %v273 = vld [vmem:[%s238 + $0x48] sm:$0xf]
        %v274 = vld [vmem:[%s238 + $0x4c] sm:$0xf]
        %v275 = vld [vmem:[%s238 + $0x50] sm:$0xf]
        %v276 = vld [vmem:[%s238 + $0x54] sm:$0xf]
        %v277 = vld [vmem:[%s238 + $0x58] sm:$0xf]
        %v278 = vld [vmem:[%s238 + $0x5c] sm:$0xf]
        %v279 = vld [vmem:[%s238 + $0x60] sm:$0xf]
        %v280 = vld [vmem:[%s238 + $0x64] sm:$0xf]
        %v281 = vld [vmem:[%s238 + $0x68] sm:$0xf]
        %v282 = vld [vmem:[%s238 + $0x6c] sm:$0xf]
        %v283 = vld [vmem:[%s238 + $0x70] sm:$0xf]
        %v284 = vld [vmem:[%s238 + $0x74] sm:$0xf]
        %v285 = vld [vmem:[%s238 + $0x78] sm:$0xf]
        %v286 = vld [vmem:[%s238 + $0x7c] sm:$0xf]
        %v287 = vld [vmem:[%s247] sm:$0xf]
        %v288 = vld [vmem:[%s247 + $0x4] sm:$0xf]
        %v289 = vld [vmem:[%s247 + $0x8] sm:$0xf]
        %v290 = vld [vmem:[%s247 + $0xc] sm:$0xf]
        %v291 = vld [vmem:[%s247 + $0x10] sm:$0xf]
        %v292 = vld [vmem:[%s247 + $0x14] sm:$0xf]
        %v325 = vunpack.c.l.b16 %v255
        %v326 = vunpack.c.l.b16 %v256
        %v327 = vunpack.c.l.b16 %v257
        %v328 = vunpack.c.l.b16 %v258
        %v329 = vunpack.c.l.b16 %v259
        %v330 = vunpack.c.l.b16 %v260
        %v331 = vunpack.c.l.b16 %v261
        %v332 = vunpack.c.l.b16 %v262
        %v333 = vunpack.c.l.b16 %v263
        %v334 = vunpack.c.l.b16 %v264
        %v335 = vunpack.c.l.b16 %v265
        %v336 = vunpack.c.l.b16 %v266
        %v337 = vunpack.c.l.b16 %v267
        %v338 = vunpack.c.l.b16 %v268
        %v339 = vunpack.c.l.b16 %v269
        %v340 = vunpack.c.l.b16 %v270
        %v341 = vunpack.c.l.b16 %v271
        %v342 = vunpack.c.l.b16 %v272
        %v343 = vunpack.c.l.b16 %v273
        %v344 = vunpack.c.l.b16 %v274
        %v345 = vunpack.c.l.b16 %v275
        %v346 = vunpack.c.l.b16 %v276
        %v347 = vunpack.c.l.b16 %v277
        %v348 = vunpack.c.l.b16 %v278
        %v349 = vunpack.c.l.b16 %v279
        %v350 = vunpack.c.l.b16 %v280
        %v351 = vunpack.c.l.b16 %v281
        %v352 = vunpack.c.l.b16 %v282
        %v353 = vunpack.c.l.b16 %v283
        %v354 = vunpack.c.l.b16 %v284
        %v355 = vunpack.c.l.b16 %v285
        %v356 = vunpack.c.l.b16 %v286
        %v357 = vpack.c.b16 %v326, %v325
        %v358 = vpack.c.b16 %v328, %v327
        %v359 = vpack.c.b16 %v330, %v329
        %v360 = vpack.c.b16 %v332, %v331
        %v361 = vpack.c.b16 %v334, %v333
        %v362 = vpack.c.b16 %v336, %v335
        %v363 = vpack.c.b16 %v338, %v337
        %v364 = vpack.c.b16 %v340, %v339
        %v365 = vpack.c.b16 %v342, %v341
        %v366 = vpack.c.b16 %v344, %v343
        %v367 = vpack.c.b16 %v346, %v345
        %v368 = vpack.c.b16 %v348, %v347
        %v369 = vpack.c.b16 %v350, %v349
        %v370 = vpack.c.b16 %v352, %v351
        %v371 = vpack.c.b16 %v354, %v353
        %v372 = vpack.c.b16 %v356, %v355
        %v379 = vunpack.c.l.b16 %v287
        %v380 = vunpack.c.l.b16 %v288
        %v381 = vunpack.c.l.b16 %v289
        %v382 = vunpack.c.l.b16 %v290
        %v383 = vunpack.c.l.b16 %v291
        %v384 = vunpack.c.l.b16 %v292
        %v385 = vpack.c.b16 %v380, %v379
        %v386 = vpack.c.b16 %v382, %v381
        %v387 = vpack.c.b16 %v384, %v383
        %vm391 = vcmask 392192
        %v393 = vsel %vm391, %v357, 0
        %v396 = vsel %vm391, %v358, 0
        %v399 = vsel %vm391, %v359, 0
        %v402 = vsel %vm391, %v360, 0
        %v405 = vsel %vm391, %v361, 0
        %v408 = vsel %vm391, %v362, 0
        %v411 = vsel %vm391, %v363, 0
        %v414 = vsel %vm391, %v364, 0
        %v417 = vsel %vm391, %v365, 0
        %v420 = vsel %vm391, %v366, 0
        %v423 = vsel %vm391, %v367, 0
        %v426 = vsel %vm391, %v368, 0
        %v429 = vsel %vm391, %v369, 0
        %v432 = vsel %vm391, %v370, 0
        %v435 = vsel %vm391, %v371, 0
        %v438 = vsel %vm391, %v372, 0
        %440 = vmatpush.bf16.msra.mxu0 0
        %441 = vmatpush.bf16.msra.mxu0 0
        %442 = vmatpush.bf16.msra.mxu0 0
        %443 = vmatpush.bf16.msra.mxu0 0
        %444 = vmatpush.bf16.msra.mxu0 0
        %445 = vmatpush.bf16.msra.mxu0 %v387
        %446 = vmatpush.bf16.msra.mxu0 %v386
        %447 = vmatpush.bf16.msra.mxu0 %v385
        %448 = vmatmul.bf16.gmra.mxu0 %v393
        %v449 = vpop.f32.mrf.mxu0
        %v450 = vadd.f32 0.0, %v449
        %v451 = vpop.f32.mrf.mxu0
        %v452 = vadd.f32 0.0, %v451
        %453 = vmatmul.bf16.gmra.mxu0 %v396
        %v454 = vpop.f32.mrf.mxu0
        %v455 = vadd.f32 0.0, %v454
        %v456 = vpop.f32.mrf.mxu0
        %v457 = vadd.f32 0.0, %v456
        %458 = vmatmul.bf16.gmra.mxu0 %v399
        %v459 = vpop.f32.mrf.mxu0
        %v460 = vadd.f32 0.0, %v459
        %v461 = vpop.f32.mrf.mxu0
        %v462 = vadd.f32 0.0, %v461
        %463 = vmatmul.bf16.gmra.mxu0 %v402
        %v464 = vpop.f32.mrf.mxu0
        %v465 = vadd.f32 0.0, %v464
        %v466 = vpop.f32.mrf.mxu0
        %v467 = vadd.f32 0.0, %v466
        %468 = vmatmul.bf16.gmra.mxu0 %v405
        %v469 = vpop.f32.mrf.mxu0
        %v470 = vadd.f32 0.0, %v469
        %v471 = vpop.f32.mrf.mxu0
        %v472 = vadd.f32 0.0, %v471
        %473 = vmatmul.bf16.gmra.mxu0 %v408
        %v474 = vpop.f32.mrf.mxu0
        %v475 = vadd.f32 0.0, %v474
        %v476 = vpop.f32.mrf.mxu0
        %v477 = vadd.f32 0.0, %v476
        %478 = vmatmul.bf16.gmra.mxu0 %v411
        %v479 = vpop.f32.mrf.mxu0
        %v480 = vadd.f32 0.0, %v479
        %v481 = vpop.f32.mrf.mxu0
        %v482 = vadd.f32 0.0, %v481
        %483 = vmatmul.bf16.gmra.mxu0 %v414
        %v484 = vpop.f32.mrf.mxu0
        %v485 = vadd.f32 0.0, %v484
        %v486 = vpop.f32.mrf.mxu0
        %v487 = vadd.f32 0.0, %v486
        %488 = vmatmul.bf16.gmra.mxu0 %v417
        %v489 = vpop.f32.mrf.mxu0
        %v490 = vadd.f32 0.0, %v489
        %v491 = vpop.f32.mrf.mxu0
        %v492 = vadd.f32 0.0, %v491
        %493 = vmatmul.bf16.gmra.mxu0 %v420
        %v494 = vpop.f32.mrf.mxu0
        %v495 = vadd.f32 0.0, %v494
        %v496 = vpop.f32.mrf.mxu0
        %v497 = vadd.f32 0.0, %v496
        %498 = vmatmul.bf16.gmra.mxu0 %v423
        %v499 = vpop.f32.mrf.mxu0
        %v500 = vadd.f32 0.0, %v499
        %v501 = vpop.f32.mrf.mxu0
        %v502 = vadd.f32 0.0, %v501
        %503 = vmatmul.bf16.gmra.mxu0 %v426
        %v504 = vpop.f32.mrf.mxu0
        %v505 = vadd.f32 0.0, %v504
        %v506 = vpop.f32.mrf.mxu0
        %v507 = vadd.f32 0.0, %v506
        %508 = vmatmul.bf16.gmra.mxu0 %v429
        %v509 = vpop.f32.mrf.mxu0
        %v510 = vadd.f32 0.0, %v509
        %v511 = vpop.f32.mrf.mxu0
        %v512 = vadd.f32 0.0, %v511
        %513 = vmatmul.bf16.gmra.mxu0 %v432
        %v514 = vpop.f32.mrf.mxu0
        %v515 = vadd.f32 0.0, %v514
        %v516 = vpop.f32.mrf.mxu0
        %v517 = vadd.f32 0.0, %v516
        %518 = vmatmul.bf16.gmra.mxu0 %v435
        %v519 = vpop.f32.mrf.mxu0
        %v520 = vadd.f32 0.0, %v519
        %v521 = vpop.f32.mrf.mxu0
        %v522 = vadd.f32 0.0, %v521
        %523 = vmatmul.bf16.gmra.mxu0 %v438
        %v524 = vpop.f32.mrf.mxu0
        %v525 = vadd.f32 0.0, %v524
        %v526 = vpop.f32.mrf.mxu0
        %v527 = vadd.f32 0.0, %v526
        %528 = vdwg.mxu0
        %v529 = vld [vmem:[%s252] sm:$0x1]
        %v530 = vperm.slane %v529, 0
        %v531 = vmul.f32 %v450, %v530
        %v532 = vmul.f32 %v452, %v530
        %v533 = vmul.f32 %v455, %v530
        %v534 = vmul.f32 %v457, %v530
        %v535 = vmul.f32 %v460, %v530
        %v536 = vmul.f32 %v462, %v530
        %v537 = vmul.f32 %v465, %v530
        %v538 = vmul.f32 %v467, %v530
        %v539 = vmul.f32 %v470, %v530
        %v540 = vmul.f32 %v472, %v530
        %v541 = vmul.f32 %v475, %v530
        %v542 = vmul.f32 %v477, %v530
        %v543 = vmul.f32 %v480, %v530
        %v544 = vmul.f32 %v482, %v530
        %v545 = vmul.f32 %v485, %v530
        %v546 = vmul.f32 %v487, %v530
        %v547 = vmul.f32 %v490, %v530
        %v548 = vmul.f32 %v492, %v530
        %v549 = vmul.f32 %v495, %v530
        %v550 = vmul.f32 %v497, %v530
        %v551 = vmul.f32 %v500, %v530
        %v552 = vmul.f32 %v502, %v530
        %v553 = vmul.f32 %v505, %v530
        %v554 = vmul.f32 %v507, %v530
        %v555 = vmul.f32 %v510, %v530
        %v556 = vmul.f32 %v512, %v530
        %v557 = vmul.f32 %v515, %v530
        %v558 = vmul.f32 %v517, %v530
        %v559 = vmul.f32 %v520, %v530
        %v560 = vmul.f32 %v522, %v530
        %v561 = vmul.f32 %v525, %v530
        %v562 = vmul.f32 %v527, %v530
        %v563 = vld [vmem:[%s252 + $0x1] sm:$0x1]
        %v564 = vperm.slane %v563, 0
        %v565 = vadd.f32 %v531, %v564
        %v566 = vadd.f32 %v532, %v564
        %v567 = vadd.f32 %v533, %v564
        %v568 = vadd.f32 %v534, %v564
        %v569 = vadd.f32 %v535, %v564
        %v570 = vadd.f32 %v536, %v564
        %v571 = vadd.f32 %v537, %v564
        %v572 = vadd.f32 %v538, %v564
        %v573 = vadd.f32 %v539, %v564
        %v574 = vadd.f32 %v540, %v564
        %v575 = vadd.f32 %v541, %v564
        %v576 = vadd.f32 %v542, %v564
        %v577 = vadd.f32 %v543, %v564
        %v578 = vadd.f32 %v544, %v564
        %v579 = vadd.f32 %v545, %v564
        %v580 = vadd.f32 %v546, %v564
        %v581 = vadd.f32 %v547, %v564
        %v582 = vadd.f32 %v548, %v564
        %v583 = vadd.f32 %v549, %v564
        %v584 = vadd.f32 %v550, %v564
        %v585 = vadd.f32 %v551, %v564
        %v586 = vadd.f32 %v552, %v564
        %v587 = vadd.f32 %v553, %v564
        %v588 = vadd.f32 %v554, %v564
        %v589 = vadd.f32 %v555, %v564
        %v590 = vadd.f32 %v556, %v564
        %v591 = vadd.f32 %v557, %v564
        %v592 = vadd.f32 %v558, %v564
        %v593 = vadd.f32 %v559, %v564
        %v594 = vadd.f32 %v560, %v564
        %v595 = vadd.f32 %v561, %v564
        %v596 = vadd.f32 %v562, %v564
        %v597 = vmax.f32 %v565, 0.0
        %v598 = vmax.f32 %v566, 0.0
        %v599 = vmax.f32 %v567, 0.0
        %v600 = vmax.f32 %v568, 0.0
        %v601 = vmax.f32 %v569, 0.0
        %v602 = vmax.f32 %v570, 0.0
        %v603 = vmax.f32 %v571, 0.0
        %v604 = vmax.f32 %v572, 0.0
        %v605 = vmax.f32 %v573, 0.0
        %v606 = vmax.f32 %v574, 0.0
        %v607 = vmax.f32 %v575, 0.0
        %v608 = vmax.f32 %v576, 0.0
        %v609 = vmax.f32 %v577, 0.0
        %v610 = vmax.f32 %v578, 0.0
        %v611 = vmax.f32 %v579, 0.0
        %v612 = vmax.f32 %v580, 0.0
        %v613 = vmax.f32 %v581, 0.0
        %v614 = vmax.f32 %v582, 0.0
        %v615 = vmax.f32 %v583, 0.0
        %v616 = vmax.f32 %v584, 0.0
        %v617 = vmax.f32 %v585, 0.0
        %v618 = vmax.f32 %v586, 0.0
        %v619 = vmax.f32 %v587, 0.0
        %v620 = vmax.f32 %v588, 0.0
        %v621 = vmax.f32 %v589, 0.0
        %v622 = vmax.f32 %v590, 0.0
        %v623 = vmax.f32 %v591, 0.0
        %v624 = vmax.f32 %v592, 0.0
        %v625 = vmax.f32 %v593, 0.0
        %v626 = vmax.f32 %v594, 0.0
        %v627 = vmax.f32 %v595, 0.0
        %v628 = vmax.f32 %v596, 0.0
        %629 = vst [vmem:[%s230] sm:$0xff] %v597
        %630 = vst [vmem:[%s230 + $0x8] sm:$0xff] %v598
        %631 = vst [vmem:[%s230 + $0x10] sm:$0xff] %v599
        %632 = vst [vmem:[%s230 + $0x18] sm:$0xff] %v600
        %633 = vst [vmem:[%s230 + $0x20] sm:$0xff] %v601
        %634 = vst [vmem:[%s230 + $0x28] sm:$0xff] %v602
        %635 = vst [vmem:[%s230 + $0x30] sm:$0xff] %v603
        %636 = vst [vmem:[%s230 + $0x38] sm:$0xff] %v604
        %637 = vst [vmem:[%s230 + $0x40] sm:$0xff] %v605
        %638 = vst [vmem:[%s230 + $0x48] sm:$0xff] %v606
        %639 = vst [vmem:[%s230 + $0x50] sm:$0xff] %v607
        %640 = vst [vmem:[%s230 + $0x58] sm:$0xff] %v608
        %641 = vst [vmem:[%s230 + $0x60] sm:$0xff] %v609
        %642 = vst [vmem:[%s230 + $0x68] sm:$0xff] %v610
        %643 = vst [vmem:[%s230 + $0x70] sm:$0xff] %v611
        %644 = vst [vmem:[%s230 + $0x78] sm:$0xff] %v612
        %645 = vst [vmem:[%s230 + $0x80] sm:$0xff] %v613
        %646 = vst [vmem:[%s230 + $0x88] sm:$0xff] %v614
        %647 = vst [vmem:[%s230 + $0x90] sm:$0xff] %v615
        %648 = vst [vmem:[%s230 + $0x98] sm:$0xff] %v616
        %649 = vst [vmem:[%s230 + $0xa0] sm:$0xff] %v617
        %650 = vst [vmem:[%s230 + $0xa8] sm:$0xff] %v618
        %651 = vst [vmem:[%s230 + $0xb0] sm:$0xff] %v619
        %652 = vst [vmem:[%s230 + $0xb8] sm:$0xff] %v620
        %653 = vst [vmem:[%s230 + $0xc0] sm:$0xff] %v621
        %654 = vst [vmem:[%s230 + $0xc8] sm:$0xff] %v622
        %655 = vst [vmem:[%s230 + $0xd0] sm:$0xff] %v623
        %656 = vst [vmem:[%s230 + $0xd8] sm:$0xff] %v624
        %657 = vst [vmem:[%s230 + $0xe0] sm:$0xff] %v625
        %658 = vst [vmem:[%s230 + $0xe8] sm:$0xff] %v626
        %659 = vst [vmem:[%s230 + $0xf0] sm:$0xff] %v627
        %660 = vst [vmem:[%s230 + $0xf8] sm:$0xff] %v628
        %s661 = sand.u32 %s128, 1
        %s662 = scalar_lea.sflag [#allocation3], %s661
        %s663 = sand.u32 %s128, 1
        %s664 = smul.addr %s663, 256
        %s665 = scalar_lea.vmem [#allocation2], %s664
        // Predicated region
        $region33: #{tpu_custom_call.1} parent=31 // pred_check
          %p666 = pneg %p138
        $region34: #{tpu_custom_call.1} parent=31 // pred_check_branch
          %668 = sbr.rel (%p666) target = $region36
        $region35: #{tpu_custom_call.1} parent=31 // pred_region
          %s669 = smul.u32 32, %s22
          %671 = vsyncadd %s662, 0
          %s672 = sadd.s32 %s23, %s669
          %s673 = smul.addr %s672, 8
          %s674 = scalar_lea.hbm %s3, %s673
          %s675 = sshll.u32 %s665, 4
          %s676 = int_to_ptr.vmem [resolvable:$true] %s675
          %s677 = sshll.u32 %s674, 4
          %s678 = int_to_ptr.hbm [resolvable:$true] %s677
          %683 = dma.vmem_to_hbm [thread:$0]  %s676, 4096, %s678, %s662, 128, 128, 8
        $region36: #{tpu_custom_call.1} parent=31 // pred_fallthru
          _
      $region32: #{tpu_custom_call.1} parent=5 // pred_fallthru
        _
      %p684 = scmp.le.s32.totalorder 2, %s12
      // Predicated region
      $region37: #{tpu_custom_call.1} parent=5 // pred_check
        %p685 = pneg %p684
      $region38: #{tpu_custom_call.1} parent=5 // pred_check_branch
        %687 = sbr.rel (%p685) target = $region40
      $region39: #{tpu_custom_call.1} parent=5 // pred_region
        %s688 = ssub.s32 %s12, 2
        // Predicated region
        $region41: #{tpu_custom_call.1} parent=39 // pred_check
          %p689 = pneg %p144
        $region42: #{tpu_custom_call.1} parent=39 // pred_check_branch
          %691 = sbr.rel (%p689) target = $region44
        $region43: #{tpu_custom_call.1} parent=39 // pred_region
          %s692 = sand.u32 %s129, 1
          %s693 = scalar_lea.sflag [#allocation3], %s692
          %s694 = sand.u32 %s129, 1
          %s695 = smul.addr %s694, 256
          %s696 = scalar_lea.vmem [#allocation2], %s695
          %698 = dma.done %s693, 4096
        $region44: #{tpu_custom_call.1} parent=39 // pred_fallthru
          _
      $region40: #{tpu_custom_call.1} parent=5 // pred_fallthru
        _
    $region6: #{tpu_custom_call.1} parent=1 // loop_footer
      %s16 = sadd.s32 1, %s12
    $region7: #{tpu_custom_call.1} parent=1 // loop_footer_branch
      %11 = sbr.rel target = $region3
    $region8: #{tpu_custom_call.1} parent=1 // loop_exit
      _
    %699 = vsyncpa [#allocation3], 1
    %s700 = scalar_lea.sflag [#allocation3], 1
    %701 = vsyncpa %s700, 1

</llo_original>
